<compile_context>
chip_gen: v7x
topology: tpu7x:2x2x1
jax: 0.10.0
libtpu: 0.0.40
codegen_flags: <defaults>
</compile_context>

<pallas_src>
import jax
import jax.numpy as jnp
from jax.experimental import pallas as pl
from jax.experimental.pallas import tpu as pltpu


_LANE = 128
# VMEM budget used to size the spatial tile (all double-buffered blocks per grid step).
# Kept comfortably below the scoped limit we request below so it fits on every
# generation (v5e/v6e: 128 MiB physical, v7x: 64 MiB physical).
_TILE_VMEM_BUDGET = 24 * 1024 * 1024
_VMEM_LIMIT_BYTES = 32 * 1024 * 1024


def _round_up(x, m):
    return ((x + m - 1) // m) * m


def _pick_tile(hw, nc, seg_bytes):
    """Largest lane-dense (multiple-of-128) spatial tile fitting the VMEM budget."""
    # Bytes per spatial element resident per grid step, double-buffered:
    #   inputs : label int32 (4) + mask f32 (4) + image 3xf32 (12)      = 20
    #   outputs: img_norm 3xf32 (12) + cimg 3xf32 (12)                  = 24
    #            + (sem + cseg) = 2 * nc * seg_bytes
    per_elem = 2 * (44 + 2 * nc * seg_bytes)
    tile = max(_LANE, (_TILE_VMEM_BUDGET // per_elem) // _LANE * _LANE)
    hw128 = _round_up(hw, _LANE)
    return min(hw128, tile)


def _preprocess_kernel(label_ref, image_ref, mask_ref,
                       sem_ref, img_norm_ref, cseg_ref, cimg_ref):
    # Blocks (lane-dense flattened-spatial layout, T = spatial tile, multiple of 128):
    #   label_ref : (1, 1, T)   int32
    #   image_ref : (1, 3, T)   float32
    #   mask_ref  : (1, 1, T)   float32
    #   sem_ref, cseg_ref : (1, nc, T)   (bf16 by default, values exactly 0/1)
    #   img_norm_ref, cimg_ref : (1, 3, T) float32
    label = label_ref[...]
    image = image_ref[...]
    mask = mask_ref[...]

    # One-hot scatter along the channel dim: input_label.scatter_(1, label_map, 1.0).
    # NOTE: a label value >= nc yields an all-zero channel column (jax.nn.one_hot
    # semantics); PyTorch scatter_ would raise on such an index.
    ch_idx = jax.lax.broadcasted_iota(jnp.int32, sem_ref.shape, 1)
    sem = (ch_idx == label).astype(jnp.float32)
    sem_ref[...] = sem.astype(sem_ref.dtype)

    # corrupted_seg = occ_mask * input_semantics   (exact in bf16: values stay 0/1)
    cseg_ref[...] = (mask * sem).astype(cseg_ref.dtype)

    # normalize(x) = (x - 0.5) / 0.5 == 2*x - 1 (exact in f32)
    img_norm_ref[...] = (image * 2.0 - 1.0).astype(img_norm_ref.dtype)
    cimg_ref[...] = ((mask * image) * 2.0 - 1.0).astype(cimg_ref.dtype)


def seg_inpaint_preprocess(label_map, image, occ_mask, *, label_nc,
                           contain_dontcare_label=False,
                           seg_dtype=jnp.bfloat16):
    """Pallas implementation of SegInpaintModel.preprocess_input.

    Returns (input_semantics, real_image_norm, corrupted_seg, corrupted_img_norm,
    occ_mask) — the same tuple as the PyTorch method (occ_mask passed through).

    `seg_dtype` controls the dtype of the two one-hot tensors; bfloat16 is lossless
    (values are exactly 0.0/1.0) and halves the dominant HBM write traffic.  Pass
    jnp.float32 for dtype parity with the original FloatTensor outputs.
    """
    B, _, H, W = label_map.shape
    nc = label_nc + 1 if contain_dontcare_label else label_nc
    assert image.shape == (B, 3, H, W)
    assert occ_mask.shape == (B, 1, H, W)

    HW = H * W
    seg_bytes = jnp.dtype(seg_dtype).itemsize
    tile = _pick_tile(HW, nc, seg_bytes)
    hw_pad = _round_up(HW, tile)
    n_tiles = hw_pad // tile

    # Flatten spatial dims into one lane-dense last axis and pad it so `tile` divides
    # it exactly.  Padding is sliced back off after the call.
    # TODO(synk): labels could be carried as int8/uint8 end-to-end (nc < 256) to shave
    # input bytes; kept int32 here since inputs are a small fraction of total traffic.
    def _flat(x, dtype):
        x = x.reshape(B, x.shape[1], HW).astype(dtype)
        if hw_pad != HW:
            x = jnp.pad(x, ((0, 0), (0, 0), (0, hw_pad - HW)))
        return x

    label_f = _flat(label_map, jnp.int32)
    image_f = _flat(image, jnp.float32)
    mask_f = _flat(occ_mask, jnp.float32)

    grid = (B, n_tiles)
    in_specs = [
        pl.BlockSpec((1, 1, tile), lambda b, t: (b, 0, t)),    # label
        pl.BlockSpec((1, 3, tile), lambda b, t: (b, 0, t)),    # image
        pl.BlockSpec((1, 1, tile), lambda b, t: (b, 0, t)),    # occ mask
    ]
    out_specs = [
        pl.BlockSpec((1, nc, tile), lambda b, t: (b, 0, t)),   # input_semantics
        pl.BlockSpec((1, 3, tile), lambda b, t: (b, 0, t)),    # normalized image
        pl.BlockSpec((1, nc, tile), lambda b, t: (b, 0, t)),   # corrupted_seg
        pl.BlockSpec((1, 3, tile), lambda b, t: (b, 0, t)),    # corrupted_img (norm)
    ]
    out_shapes = (
        jax.ShapeDtypeStruct((B, nc, hw_pad), seg_dtype),
        jax.ShapeDtypeStruct((B, 3, hw_pad), jnp.float32),
        jax.ShapeDtypeStruct((B, nc, hw_pad), seg_dtype),
        jax.ShapeDtypeStruct((B, 3, hw_pad), jnp.float32),
    )

    sem, img_norm, cseg, cimg = pl.pallas_call(
        _preprocess_kernel,
        out_shape=out_shapes,
        grid_spec=pltpu.PrefetchScalarGridSpec(
            num_scalar_prefetch=0,
            grid=grid,
            in_specs=in_specs,
            out_specs=out_specs,
        ),
        compiler_params=pltpu.CompilerParams(
            dimension_semantics=("parallel", "parallel"),
            vmem_limit_bytes=_VMEM_LIMIT_BYTES,
        ),
    )(label_f, image_f, mask_f)

    def _unflat(x, c):
        return x[:, :, :HW].reshape(B, c, H, W)

    return (_unflat(sem, nc), _unflat(img_norm, 3),
            _unflat(cseg, nc), _unflat(cimg, 3), occ_mask)


# TODO(synk): SPNet / SGNet / MultiscaleDiscriminator / GANLoss / GANFeatMatchingLoss /
# VGGLoss are external modules not defined in this file; the 'spn'/'sgn'/'d_seg'/'d_img'
# loss branches of forward() cannot be translated without their definitions.


def _reference_preprocess(label_map, image, occ_mask, nc):
    """Pure-JAX reference for correctness check."""
    sem = jax.nn.one_hot(label_map[:, 0], nc, axis=1, dtype=jnp.float32)  # (B,nc,H,W)
    cseg = occ_mask * sem
    cimg = occ_mask * image
    return sem, (image - 0.5) / 0.5, cseg, (cimg - 0.5) / 0.5


def _run_case(key, B, H, W, label_nc, contain_dontcare_label):
    import numpy as np
    k1, k2, k3 = jax.random.split(key, 3)
    nc = label_nc + 1 if contain_dontcare_label else label_nc

    label_map = jax.random.randint(k1, (B, 1, H, W), 0, nc, dtype=jnp.int32)
    image = jax.random.uniform(k2, (B, 3, H, W), dtype=jnp.float32)
    occ_mask = (jax.random.uniform(k3, (B, 1, H, W)) > 0.5).astype(jnp.float32)

    outs = seg_inpaint_preprocess(
        label_map, image, occ_mask,
        label_nc=label_nc, contain_dontcare_label=contain_dontcare_label)
    outs = jax.block_until_ready(outs)
    sem, img_norm, cseg, cimg, _ = outs

    ref_sem, ref_img, ref_cseg, ref_cimg = _reference_preprocess(
        label_map, image, occ_mask, nc)

    # sem / cseg are bf16 but hold exactly 0.0 / 1.0 → exact after upcast.
    np.testing.assert_allclose(np.asarray(sem, dtype=np.float32),
                               np.asarray(ref_sem), atol=1e-6)
    np.testing.assert_allclose(np.asarray(cseg, dtype=np.float32),
                               np.asarray(ref_cseg), atol=1e-6)
    np.testing.assert_allclose(np.asarray(img_norm), np.asarray(ref_img), atol=1e-6)
    np.testing.assert_allclose(np.asarray(cimg), np.asarray(ref_cimg), atol=1e-6)


if __name__ == "__main__":
    key = jax.random.PRNGKey(0)
    ka, kb = jax.random.split(key)

    # Small case consistent with the module (NCHW label/image/mask).
    _run_case(ka, B=2, H=16, W=16, label_nc=4, contain_dontcare_label=False)
    # Non-128-multiple spatial extent + dontcare label → exercises padding path.
    _run_case(kb, B=2, H=12, W=20, label_nc=4, contain_dontcare_label=True)

    print("KERNEL_OK")
</pallas_src>

<mosaic_0001>
module attributes {stable_mosaic.version = 11 : i64} {
  func.func @_preprocess_kernel(%arg0: i32, %arg1: i32, %arg2: memref<1x1x256xi32, #tpu.memory_space<vmem>>, %arg3: memref<1x3x256xf32, #tpu.memory_space<vmem>>, %arg4: memref<1x1x256xf32, #tpu.memory_space<vmem>>, %arg5: memref<1x4x256xbf16, #tpu.memory_space<vmem>>, %arg6: memref<1x3x256xf32, #tpu.memory_space<vmem>>, %arg7: memref<1x4x256xbf16, #tpu.memory_space<vmem>>, %arg8: memref<1x3x256xf32, #tpu.memory_space<vmem>>) attributes {dimension_semantics = [#tpu.dimension_semantics<parallel>, #tpu.dimension_semantics<parallel>], iteration_bounds = array<i64: 2, 1>, scalar_prefetch = 0 : i64, scratch_operands = 0 : i64, tpu.core_type = #tpu.core_type<tc>, window_params = [{transform_indices = @transform_0, window_bounds = array<i64: 1, 1, 256>}, {transform_indices = @transform_1, window_bounds = array<i64: 1, 3, 256>}, {transform_indices = @transform_2, window_bounds = array<i64: 1, 1, 256>}, {transform_indices = @transform_3, window_bounds = array<i64: 1, 4, 256>}, {transform_indices = @transform_4, window_bounds = array<i64: 1, 3, 256>}, {transform_indices = @transform_5, window_bounds = array<i64: 1, 4, 256>}, {transform_indices = @transform_6, window_bounds = array<i64: 1, 3, 256>}]} {
    %c0 = arith.constant 0 : index
    %c0_0 = arith.constant 0 : index
    %c0_1 = arith.constant 0 : index
    %0 = vector.load %arg2[%c0, %c0_0, %c0_1] : memref<1x1x256xi32, #tpu.memory_space<vmem>>, vector<1x1x256xi32>
    %c0_2 = arith.constant 0 : index
    %c0_3 = arith.constant 0 : index
    %c0_4 = arith.constant 0 : index
    %1 = vector.load %arg3[%c0_2, %c0_3, %c0_4] : memref<1x3x256xf32, #tpu.memory_space<vmem>>, vector<1x3x256xf32>
    %c0_5 = arith.constant 0 : index
    %c0_6 = arith.constant 0 : index
    %c0_7 = arith.constant 0 : index
    %2 = vector.load %arg4[%c0_5, %c0_6, %c0_7] : memref<1x1x256xf32, #tpu.memory_space<vmem>>, vector<1x1x256xf32>
    %3 = tpu.iota {dimensions = array<i32: 1>} : vector<1x4x256xi32>
    %4 = vector.broadcast %0 : vector<1x1x256xi32> to vector<1x4x256xi32>
    %5 = arith.cmpi eq, %3, %4 : vector<1x4x256xi32>
    %6 = arith.extui %5 : vector<1x4x256xi1> to vector<1x4x256xi32>
    %7 = arith.sitofp %6 : vector<1x4x256xi32> to vector<1x4x256xf32>
    %8 = arith.truncf %7 : vector<1x4x256xf32> to vector<1x4x256xbf16>
    %c0_8 = arith.constant 0 : index
    %c0_9 = arith.constant 0 : index
    %c0_10 = arith.constant 0 : index
    %9 = vector.load %arg5[%c0_8, %c0_9, %c0_10] : memref<1x4x256xbf16, #tpu.memory_space<vmem>>, vector<1x4x256xbf16>
    tpu.vector_store %arg5[%c0_8, %c0_9, %c0_10], %8 {strides = array<i32>} : memref<1x4x256xbf16, #tpu.memory_space<vmem>>, vector<1x4x256xbf16>,
    %10 = vector.broadcast %2 : vector<1x1x256xf32> to vector<1x4x256xf32>
    %11 = arith.mulf %10, %7 : vector<1x4x256xf32>
    %12 = arith.truncf %11 : vector<1x4x256xf32> to vector<1x4x256xbf16>
    %c0_11 = arith.constant 0 : index
    %c0_12 = arith.constant 0 : index
    %c0_13 = arith.constant 0 : index
    %13 = vector.load %arg7[%c0_11, %c0_12, %c0_13] : memref<1x4x256xbf16, #tpu.memory_space<vmem>>, vector<1x4x256xbf16>
    tpu.vector_store %arg7[%c0_11, %c0_12, %c0_13], %12 {strides = array<i32>} : memref<1x4x256xbf16, #tpu.memory_space<vmem>>, vector<1x4x256xbf16>,
    %cst = arith.constant 2.000000e+00 : f32
    %14 = vector.broadcast %cst : f32 to vector<1x3x256xf32>
    %15 = arith.mulf %1, %14 : vector<1x3x256xf32>
    %cst_14 = arith.constant 1.000000e+00 : f32
    %16 = vector.broadcast %cst_14 : f32 to vector<1x3x256xf32>
    %17 = arith.subf %15, %16 : vector<1x3x256xf32>
    %c0_15 = arith.constant 0 : index
    %c0_16 = arith.constant 0 : index
    %c0_17 = arith.constant 0 : index
    %18 = vector.load %arg6[%c0_15, %c0_16, %c0_17] : memref<1x3x256xf32, #tpu.memory_space<vmem>>, vector<1x3x256xf32>
    tpu.vector_store %arg6[%c0_15, %c0_16, %c0_17], %17 {strides = array<i32>} : memref<1x3x256xf32, #tpu.memory_space<vmem>>, vector<1x3x256xf32>,
    %19 = vector.broadcast %2 : vector<1x1x256xf32> to vector<1x3x256xf32>
    %20 = arith.mulf %19, %1 : vector<1x3x256xf32>
    %cst_18 = arith.constant 2.000000e+00 : f32
    %21 = vector.broadcast %cst_18 : f32 to vector<1x3x256xf32>
    %22 = arith.mulf %20, %21 : vector<1x3x256xf32>
    %cst_19 = arith.constant 1.000000e+00 : f32
    %23 = vector.broadcast %cst_19 : f32 to vector<1x3x256xf32>
    %24 = arith.subf %22, %23 : vector<1x3x256xf32>
    %c0_20 = arith.constant 0 : index
    %c0_21 = arith.constant 0 : index
    %c0_22 = arith.constant 0 : index
    %25 = vector.load %arg8[%c0_20, %c0_21, %c0_22] : memref<1x3x256xf32, #tpu.memory_space<vmem>>, vector<1x3x256xf32>
    tpu.vector_store %arg8[%c0_20, %c0_21, %c0_22], %24 {strides = array<i32>} : memref<1x3x256xf32, #tpu.memory_space<vmem>>, vector<1x3x256xf32>,
    return
  }
  func.func @transform_0(%arg0: i32, %arg1: i32) -> (i32, i32, i32) {
    %c0_i32 = arith.constant 0 : i32
    %c0_i32_0 = arith.constant 0 : i32
    return %arg0, %c0_i32, %arg1 : i32, i32, i32
  }
  func.func @transform_1(%arg0: i32, %arg1: i32) -> (i32, i32, i32) {
    %c0_i32 = arith.constant 0 : i32
    %c0_i32_0 = arith.constant 0 : i32
    return %arg0, %c0_i32, %arg1 : i32, i32, i32
  }
  func.func @transform_2(%arg0: i32, %arg1: i32) -> (i32, i32, i32) {
    %c0_i32 = arith.constant 0 : i32
    %c0_i32_0 = arith.constant 0 : i32
    return %arg0, %c0_i32, %arg1 : i32, i32, i32
  }
  func.func @transform_3(%arg0: i32, %arg1: i32) -> (i32, i32, i32) {
    %c0_i32 = arith.constant 0 : i32
    %c0_i32_0 = arith.constant 0 : i32
    return %arg0, %c0_i32, %arg1 : i32, i32, i32
  }
  func.func @transform_4(%arg0: i32, %arg1: i32) -> (i32, i32, i32) {
    %c0_i32 = arith.constant 0 : i32
    %c0_i32_0 = arith.constant 0 : i32
    return %arg0, %c0_i32, %arg1 : i32, i32, i32
  }
  func.func @transform_5(%arg0: i32, %arg1: i32) -> (i32, i32, i32) {
    %c0_i32 = arith.constant 0 : i32
    %c0_i32_0 = arith.constant 0 : i32
    return %arg0, %c0_i32, %arg1 : i32, i32, i32
  }
  func.func @transform_6(%arg0: i32, %arg1: i32) -> (i32, i32, i32) {
    %c0_i32 = arith.constant 0 : i32
    %c0_i32_0 = arith.constant 0 : i32
    return %arg0, %c0_i32, %arg1 : i32, i32, i32
  }
}

</mosaic_0001>

<llo_original>
// kernel: tpu_custom_call.1
$region0: #{tpu_custom_call.1}
  #allocation0 [shape = 'u32[]', space=smem, size = 0x4, offset = 0x4, fixed_abs, tag = 'smem constant byte address 0x4 - core index']
  #allocation1 [shape = 'u32[144,128]{1,0:T(1,128)}', space=vmem, size = 0x12000, scoped, tag = 'internal scratch']
  %s0 = inlined_call_operand.vmem [shape: s32[2,1,256], index: 0, kind: input, shape index: {}]
  %s1 = inlined_call_operand.vmem [shape: f32[2,3,256], index: 1, kind: input, shape index: {}]
  %s2 = inlined_call_operand.vmem [shape: f32[2,1,256], index: 2, kind: input, shape index: {}]
  %s3 = inlined_call_operand.hbm [shape: bf16[2,4,256], index: 3, kind: output, shape index: {0}]
  %s4 = inlined_call_operand.vmem [shape: f32[2,3,256], index: 4, kind: output, shape index: {1}]
  %s5 = inlined_call_operand.hbm [shape: bf16[2,4,256], index: 5, kind: output, shape index: {2}]
  %s6 = inlined_call_operand.vmem [shape: f32[2,3,256], index: 6, kind: output, shape index: {3}]
  %7 = xla_tuple %s3, %s4, %s5, %s6
  %s8 = sld [smem:[#allocation0]]
  $region69: #{tpu_custom_call.1} parent=0
    _
  %s10 = ssub.s32 1, %s8
  %s11 = scalar_select 0, %s10, %s8
  $region1: #{tpu_custom_call.1} parent=0
    #allocation2 [shape = 'u8[4096]{0}', space=vmem, size = 0x1000, scoped, tag = 'output window, operand 0']
    #allocation3 [shape = 's32[2]{0}', space=sflag, size = 0x8, scoped, tag = 'scoped memory for tpu_custom_call.1']
    #allocation4 [shape = 'u8[4096]{0}', space=vmem, size = 0x1000, scoped, tag = 'output window, operand 2']
    #allocation5 [shape = 's32[2]{0}', space=sflag, size = 0x8, scoped, tag = 'scoped memory for tpu_custom_call.1']
    %12 = vsyncpa [#allocation3], 0
    %s13 = scalar_lea.sflag [#allocation3], 1
    %14 = vsyncpa %s13, 0
    %15 = vsyncpa [#allocation5], 0
    %s16 = scalar_lea.sflag [#allocation5], 1
    %17 = vsyncpa %s16, 0
    loop: start=0, step=1, limit=4
    $region2: #{tpu_custom_call.1} parent=1 // loop_pre_header
      _
    $region3: #{tpu_custom_call.1} parent=1 // loop_header
      %s19 = sphi 0, %s23
      %p20 = scmp.ge.s32.totalorder %s19, 4
      %s26 = sphi 0, %s38
      %s27 = sphi 0, %s34
      %s28 = sphi 0, %s26
      %s29 = sphi 0, %s27
      %s30 = sphi 0, %s28
      %s31 = sphi 0, %s29
      %s43 = sphi 0, %s45
      %s46 = sphi 0, %s43
      %s47 = sphi 0, %s46
      %s63 = sphi 0, %s47
      %s71 = sphi 0, %s73
      %s74 = sphi 0, %s71
      %s75 = sphi 0, %s74
      %s91 = sphi 0, %s75
      %s99 = sphi 0, %s101
      %s102 = sphi 0, %s99
      %s103 = sphi 0, %s102
      %s119 = sphi 0, %s103
      %s127 = sphi 0, %s129
      %s130 = sphi 0, %s127
      %s131 = sphi 0, %s130
      %s147 = sphi 0, %s131
      %s155 = sphi 0, %s157
      %s158 = sphi 0, %s155
      %s159 = sphi 0, %s158
      %s175 = sphi 0, %s159
      %s183 = sphi 0, %s185
      %s186 = sphi 0, %s183
      %s187 = sphi 0, %s186
      %s203 = sphi 0, %s187
      %s211 = sphi 0, %s213
      %s214 = sphi 0, %s211
      %s215 = sphi 0, %s214
      %s231 = sphi 0, %s215
    $region4: #{tpu_custom_call.1} parent=1 // loop_header_branch
      %22 = sbr.rel (%p20) target = $region8
    $region5: #{tpu_custom_call.1} parent=1 // loop_body
      %s24 = ssub.s32 %s19, 1
      %s25 = ssub.s32 %s19, 2
      %s32 = sadd.s32 1, %s27
      %p33 = scmp.ge.s32.totalorder %s32, 1
      %s34 = scalar_select %p33, 0, %s32
      %s35 = sadd.s32 1, %s26
      %s36 = scalar_select %p33, %s35, %s26
      %p37 = scmp.ge.s32.totalorder %s36, 2
      %s38 = scalar_select %p37, 0, %s36
      %s39 = ssub.s32 %s26, %s38
      %s40 = ssub.s32 %s27, %s34
      %s41 = sor.u32 %s39, %s40
      %p42 = scmp.eq.s32.totalorder %s41, 0
      %s44 = sadd.s32 %s43, 1
      %s45 = scalar_select %p42, %s43, %s44
      %p48 = pneg %p42
      %p49 = scmp.eq.s32.totalorder %s19, 1
      %p50 = por %p48, %p49
      %p51 = scmp.ne.s32.totalorder %s43, %s46
      %p52 = scmp.eq.s32.totalorder %s19, 0
      %p53 = por %p51, %p52
      %p54 = scmp.ne.s32.totalorder %s43, %s46
      %p55 = scmp.eq.s32.totalorder %s24, 1
      %p56 = por %p54, %p55
      %p57 = scmp.ne.s32.totalorder %s46, %s47
      %p58 = scmp.eq.s32.totalorder %s24, 0
      %p59 = por %p57, %p58
      %p60 = scmp.ne.s32.totalorder %s46, %s47
      %p61 = scmp.eq.s32.totalorder %s25, 1
      %p62 = por %p60, %p61
      %p64 = scmp.ne.s32.totalorder %s47, %s63
      %p65 = scmp.eq.s32.totalorder %s25, 0
      %p66 = por %p64, %p65
      %s67 = ssub.s32 %s26, %s38
      %s68 = ssub.s32 %s27, %s34
      %s69 = sor.u32 %s67, %s68
      %p70 = scmp.eq.s32.totalorder %s69, 0
      %s72 = sadd.s32 %s71, 1
      %s73 = scalar_select %p70, %s71, %s72
      %p76 = pneg %p70
      %p77 = scmp.eq.s32.totalorder %s19, 1
      %p78 = por %p76, %p77
      %p79 = scmp.ne.s32.totalorder %s71, %s74
      %p80 = scmp.eq.s32.totalorder %s19, 0
      %p81 = por %p79, %p80
      %p82 = scmp.ne.s32.totalorder %s71, %s74
      %p83 = scmp.eq.s32.totalorder %s24, 1
      %p84 = por %p82, %p83
      %p85 = scmp.ne.s32.totalorder %s74, %s75
      %p86 = scmp.eq.s32.totalorder %s24, 0
      %p87 = por %p85, %p86
      %p88 = scmp.ne.s32.totalorder %s74, %s75
      %p89 = scmp.eq.s32.totalorder %s25, 1
      %p90 = por %p88, %p89
      %p92 = scmp.ne.s32.totalorder %s75, %s91
      %p93 = scmp.eq.s32.totalorder %s25, 0
      %p94 = por %p92, %p93
      %s95 = ssub.s32 %s26, %s38
      %s96 = ssub.s32 %s27, %s34
      %s97 = sor.u32 %s95, %s96
      %p98 = scmp.eq.s32.totalorder %s97, 0
      %s100 = sadd.s32 %s99, 1
      %s101 = scalar_select %p98, %s99, %s100
      %p104 = pneg %p98
      %p105 = scmp.eq.s32.totalorder %s19, 1
      %p106 = por %p104, %p105
      %p107 = scmp.ne.s32.totalorder %s99, %s102
      %p108 = scmp.eq.s32.totalorder %s19, 0
      %p109 = por %p107, %p108
      %p110 = scmp.ne.s32.totalorder %s99, %s102
      %p111 = scmp.eq.s32.totalorder %s24, 1
      %p112 = por %p110, %p111
      %p113 = scmp.ne.s32.totalorder %s102, %s103
      %p114 = scmp.eq.s32.totalorder %s24, 0
      %p115 = por %p113, %p114
      %p116 = scmp.ne.s32.totalorder %s102, %s103
      %p117 = scmp.eq.s32.totalorder %s25, 1
      %p118 = por %p116, %p117
      %p120 = scmp.ne.s32.totalorder %s103, %s119
      %p121 = scmp.eq.s32.totalorder %s25, 0
      %p122 = por %p120, %p121
      %s123 = ssub.s32 %s26, %s38
      %s124 = ssub.s32 %s27, %s34
      %s125 = sor.u32 %s123, %s124
      %p126 = scmp.eq.s32.totalorder %s125, 0
      %s128 = sadd.s32 %s127, 1
      %s129 = scalar_select %p126, %s127, %s128
      %p132 = pneg %p126
      %p133 = scmp.eq.s32.totalorder %s19, 1
      %p134 = por %p132, %p133
      %p135 = scmp.ne.s32.totalorder %s127, %s130
      %p136 = scmp.eq.s32.totalorder %s19, 0
      %p137 = por %p135, %p136
      %p138 = scmp.ne.s32.totalorder %s127, %s130
      %p139 = scmp.eq.s32.totalorder %s24, 1
      %p140 = por %p138, %p139
      %p141 = scmp.ne.s32.totalorder %s130, %s131
      %p142 = scmp.eq.s32.totalorder %s24, 0
      %p143 = por %p141, %p142
      %p144 = scmp.ne.s32.totalorder %s130, %s131
      %p145 = scmp.eq.s32.totalorder %s25, 1
      %p146 = por %p144, %p145
      %p148 = scmp.ne.s32.totalorder %s131, %s147
      %p149 = scmp.eq.s32.totalorder %s25, 0
      %p150 = por %p148, %p149
      %s151 = ssub.s32 %s26, %s38
      %s152 = ssub.s32 %s27, %s34
      %s153 = sor.u32 %s151, %s152
      %p154 = scmp.eq.s32.totalorder %s153, 0
      %s156 = sadd.s32 %s155, 1
      %s157 = scalar_select %p154, %s155, %s156
      %p160 = pneg %p154
      %p161 = scmp.eq.s32.totalorder %s19, 1
      %p162 = por %p160, %p161
      %p163 = scmp.ne.s32.totalorder %s155, %s158
      %p164 = scmp.eq.s32.totalorder %s19, 0
      %p165 = por %p163, %p164
      %p166 = scmp.ne.s32.totalorder %s155, %s158
      %p167 = scmp.eq.s32.totalorder %s24, 1
      %p168 = por %p166, %p167
      %p169 = scmp.ne.s32.totalorder %s158, %s159
      %p170 = scmp.eq.s32.totalorder %s24, 0
      %p171 = por %p169, %p170
      %p172 = scmp.ne.s32.totalorder %s158, %s159
      %p173 = scmp.eq.s32.totalorder %s25, 1
      %p174 = por %p172, %p173
      %p176 = scmp.ne.s32.totalorder %s159, %s175
      %p177 = scmp.eq.s32.totalorder %s25, 0
      %p178 = por %p176, %p177
      %s179 = ssub.s32 %s26, %s38
      %s180 = ssub.s32 %s27, %s34
      %s181 = sor.u32 %s179, %s180
      %p182 = scmp.eq.s32.totalorder %s181, 0
      %s184 = sadd.s32 %s183, 1
      %s185 = scalar_select %p182, %s183, %s184
      %p188 = pneg %p182
      %p189 = scmp.eq.s32.totalorder %s19, 1
      %p190 = por %p188, %p189
      %p191 = scmp.ne.s32.totalorder %s183, %s186
      %p192 = scmp.eq.s32.totalorder %s19, 0
      %p193 = por %p191, %p192
      %p194 = scmp.ne.s32.totalorder %s183, %s186
      %p195 = scmp.eq.s32.totalorder %s24, 1
      %p196 = por %p194, %p195
      %p197 = scmp.ne.s32.totalorder %s186, %s187
      %p198 = scmp.eq.s32.totalorder %s24, 0
      %p199 = por %p197, %p198
      %p200 = scmp.ne.s32.totalorder %s186, %s187
      %p201 = scmp.eq.s32.totalorder %s25, 1
      %p202 = por %p200, %p201
      %p204 = scmp.ne.s32.totalorder %s187, %s203
      %p205 = scmp.eq.s32.totalorder %s25, 0
      %p206 = por %p204, %p205
      %s207 = ssub.s32 %s26, %s38
      %s208 = ssub.s32 %s27, %s34
      %s209 = sor.u32 %s207, %s208
      %p210 = scmp.eq.s32.totalorder %s209, 0
      %s212 = sadd.s32 %s211, 1
      %s213 = scalar_select %p210, %s211, %s212
      %p216 = pneg %p210
      %p217 = scmp.eq.s32.totalorder %s19, 1
      %p218 = por %p216, %p217
      %p219 = scmp.ne.s32.totalorder %s211, %s214
      %p220 = scmp.eq.s32.totalorder %s19, 0
      %p221 = por %p219, %p220
      %p222 = scmp.ne.s32.totalorder %s211, %s214
      %p223 = scmp.eq.s32.totalorder %s24, 1
      %p224 = por %p222, %p223
      %p225 = scmp.ne.s32.totalorder %s214, %s215
      %p226 = scmp.eq.s32.totalorder %s24, 0
      %p227 = por %p225, %p226
      %p228 = scmp.ne.s32.totalorder %s214, %s215
      %p229 = scmp.eq.s32.totalorder %s25, 1
      %p230 = por %p228, %p229
      %p232 = scmp.ne.s32.totalorder %s215, %s231
      %p233 = scmp.eq.s32.totalorder %s25, 0
      %p234 = por %p232, %p233
      %p235 = scmp.le.s32.totalorder 1, %s19
      %p236 = scmp.lt.s32.totalorder %s19, 3
      %p237 = pnand %p235, %p236
      %p238 = pneg %p237
      // Predicated region
      $region9: #{tpu_custom_call.1} parent=5 // pred_check
        _
      $region10: #{tpu_custom_call.1} parent=5 // pred_check_branch
        %240 = sbr.rel (%p237) target = $region12
      $region11: #{tpu_custom_call.1} parent=5 // pred_region
        %s241 = ssub.s32 %s19, 1
      $region12: #{tpu_custom_call.1} parent=5 // pred_fallthru
        _
      %p242 = scmp.lt.s32.totalorder %s19, 2
      // Predicated region
      $region13: #{tpu_custom_call.1} parent=5 // pred_check
        %p243 = pneg %p242
      $region14: #{tpu_custom_call.1} parent=5 // pred_check_branch
        %245 = sbr.rel (%p243) target = $region16
      $region15: #{tpu_custom_call.1} parent=5 // pred_region
        // Predicated region
        $region17: #{tpu_custom_call.1} parent=15 // pred_check
          %p246 = pneg %p53
        $region18: #{tpu_custom_call.1} parent=15 // pred_check_branch
          %248 = sbr.rel (%p246) target = $region20
        $region19: #{tpu_custom_call.1} parent=15 // pred_region
          %s249 = smul.u32 2, %s27
          %p250 = scmp.lt.s32.totalorder %s26, 1
          %s251 = scalar_select %p250, %s26, 1
          %p252 = scmp.lt.s32.totalorder %s249, 1
          %s253 = scalar_select %p252, %s249, 1
          %s254 = smul.addr %s251, 2
          %s255 = sadd.s32 %s253, %s254
          %s256 = scalar_lea.vmem %s0, %s255
          %s257 = smul.u32 2, %s27
        $region20: #{tpu_custom_call.1} parent=15 // pred_fallthru
          _
        // Predicated region
        $region21: #{tpu_custom_call.1} parent=15 // pred_check
          %p258 = pneg %p81
        $region22: #{tpu_custom_call.1} parent=15 // pred_check_branch
          %260 = sbr.rel (%p258) target = $region24
        $region23: #{tpu_custom_call.1} parent=15 // pred_region
          %s261 = smul.u32 2, %s27
          %p262 = scmp.lt.s32.totalorder %s26, 1
          %s263 = scalar_select %p262, %s26, 1
          %p264 = scmp.lt.s32.totalorder %s261, 1
          %s265 = scalar_select %p264, %s261, 1
          %s266 = smul.addr %s263, 2
          %s267 = sadd.s32 %s265, %s266
          %s268 = smul.addr %s267, 4
          %s269 = scalar_lea.vmem %s1, %s268
          %s270 = smul.u32 2, %s27
        $region24: #{tpu_custom_call.1} parent=15 // pred_fallthru
          _
        // Predicated region
        $region25: #{tpu_custom_call.1} parent=15 // pred_check
          %p271 = pneg %p109
        $region26: #{tpu_custom_call.1} parent=15 // pred_check_branch
          %273 = sbr.rel (%p271) target = $region28
        $region27: #{tpu_custom_call.1} parent=15 // pred_region
          %s274 = smul.u32 2, %s27
          %p275 = scmp.lt.s32.totalorder %s26, 1
          %s276 = scalar_select %p275, %s26, 1
          %p277 = scmp.lt.s32.totalorder %s274, 1
          %s278 = scalar_select %p277, %s274, 1
          %s279 = smul.addr %s276, 2
          %s280 = sadd.s32 %s278, %s279
          %s281 = scalar_lea.vmem %s2, %s280
          %s282 = smul.u32 2, %s27
        $region28: #{tpu_custom_call.1} parent=15 // pred_fallthru
          _
      $region16: #{tpu_custom_call.1} parent=5 // pred_fallthru
        _
      %p283 = scmp.le.s32.totalorder 1, %s19
      %p284 = scmp.lt.s32.totalorder %s19, 3
      %p285 = pnand %p283, %p284
      %p286 = pneg %p285
      // Predicated region
      $region29: #{tpu_custom_call.1} parent=5 // pred_check
        _
      $region30: #{tpu_custom_call.1} parent=5 // pred_check_branch
        %288 = sbr.rel (%p285) target = $region32
      $region31: #{tpu_custom_call.1} parent=5 // pred_region
        %s289 = ssub.s32 %s19, 1
        %s290 = smul.u32 2, %s29
        %p291 = scmp.lt.s32.totalorder %s28, 1
        %s292 = scalar_select %p291, %s28, 1
        %p293 = scmp.lt.s32.totalorder %s290, 1
        %s294 = scalar_select %p293, %s290, 1
        %s295 = smul.addr %s292, 2
        %s296 = sadd.s32 %s294, %s295
        %s297 = scalar_lea.vmem %s0, %s296
        %p298 = pneg %p59
        %p299 = pneg %p56
        %s300 = smul.u32 2, %s29
        %p301 = scmp.lt.s32.totalorder %s28, 1
        %s302 = scalar_select %p301, %s28, 1
        %p303 = scmp.lt.s32.totalorder %s300, 1
        %s304 = scalar_select %p303, %s300, 1
        %s305 = smul.addr %s302, 2
        %s306 = sadd.s32 %s304, %s305
        %s307 = smul.addr %s306, 4
        %s308 = scalar_lea.vmem %s1, %s307
        %p309 = pneg %p87
        %p310 = pneg %p84
        %s311 = smul.u32 2, %s29
        %p312 = scmp.lt.s32.totalorder %s28, 1
        %s313 = scalar_select %p312, %s28, 1
        %p314 = scmp.lt.s32.totalorder %s311, 1
        %s315 = scalar_select %p314, %s311, 1
        %s316 = smul.addr %s313, 2
        %s317 = sadd.s32 %s315, %s316
        %s318 = scalar_lea.vmem %s2, %s317
        %p319 = pneg %p115
        %p320 = pneg %p112
        %p321 = pneg %p143
        %p322 = pneg %p140
        %s323 = sand.u32 %s130, 1
        %s324 = scalar_lea.sflag [#allocation3], %s323
        %s325 = sand.u32 %s130, 1
        %s326 = smul.addr %s325, 4
        %s327 = scalar_lea.vmem [#allocation2], %s326
        %p328 = pneg %p171
        %p329 = pneg %p168
        %s330 = smul.u32 2, %s29
        %p331 = scmp.lt.s32.totalorder %s28, 1
        %s332 = scalar_select %p331, %s28, 1
        %p333 = scmp.lt.s32.totalorder %s330, 1
        %s334 = scalar_select %p333, %s330, 1
        %s335 = smul.addr %s332, 2
        %s336 = sadd.s32 %s334, %s335
        %s337 = smul.addr %s336, 4
        %s338 = scalar_lea.vmem %s4, %s337
        %p339 = pneg %p199
        %p340 = pneg %p196
        %s341 = sand.u32 %s186, 1
        %s342 = scalar_lea.sflag [#allocation5], %s341
        %s343 = sand.u32 %s186, 1
        %s344 = smul.addr %s343, 4
        %s345 = scalar_lea.vmem [#allocation4], %s344
        %p346 = pneg %p227
        %p347 = pneg %p224
        %s348 = smul.u32 2, %s29
        %p349 = scmp.lt.s32.totalorder %s28, 1
        %s350 = scalar_select %p349, %s28, 1
        %p351 = scmp.lt.s32.totalorder %s348, 1
        %s352 = scalar_select %p351, %s348, 1
        %s353 = smul.addr %s350, 2
        %s354 = sadd.s32 %s352, %s353
        %s355 = smul.addr %s354, 4
        %s356 = scalar_lea.vmem %s6, %s355
        %s357 = smul.u32 2, %s29
        %p358 = scmp.lt.s32.totalorder %s28, 1
        %s359 = scalar_select %p358, %s28, 1
        %p360 = scmp.lt.s32.totalorder %s357, 1
        %s361 = scalar_select %p360, %s357, 1
        %s362 = smul.addr %s359, 2
        %s363 = sadd.s32 %s361, %s362
        %s364 = scalar_lea.vmem %s0, %s363
        %s365 = smul.u32 2, %s29
        %s366 = smul.u32 2, %s29
        %p367 = scmp.lt.s32.totalorder %s28, 1
        %s368 = scalar_select %p367, %s28, 1
        %p369 = scmp.lt.s32.totalorder %s366, 1
        %s370 = scalar_select %p369, %s366, 1
        %s371 = smul.addr %s368, 2
        %s372 = sadd.s32 %s370, %s371
        %s373 = smul.addr %s372, 4
        %s374 = scalar_lea.vmem %s1, %s373
        %s375 = smul.u32 2, %s29
        %s376 = smul.u32 2, %s29
        %p377 = scmp.lt.s32.totalorder %s28, 1
        %s378 = scalar_select %p377, %s28, 1
        %p379 = scmp.lt.s32.totalorder %s376, 1
        %s380 = scalar_select %p379, %s376, 1
        %s381 = smul.addr %s378, 2
        %s382 = sadd.s32 %s380, %s381
        %s383 = scalar_lea.vmem %s2, %s382
        %s384 = smul.u32 2, %s29
        %s385 = smul.u32 2, %s29
        %s386 = smul.u32 2, %s29
        %p387 = scmp.lt.s32.totalorder %s28, 1
        %s388 = scalar_select %p387, %s28, 1
        %p389 = scmp.lt.s32.totalorder %s386, 1
        %s390 = scalar_select %p389, %s386, 1
        %s391 = smul.addr %s388, 2
        %s392 = sadd.s32 %s390, %s391
        %s393 = smul.addr %s392, 4
        %s394 = scalar_lea.vmem %s4, %s393
        %s395 = smul.u32 2, %s29
        %s396 = smul.u32 2, %s29
        %s397 = smul.u32 2, %s29
        %p398 = scmp.lt.s32.totalorder %s28, 1
        %s399 = scalar_select %p398, %s28, 1
        %p400 = scmp.lt.s32.totalorder %s397, 1
        %s401 = scalar_select %p400, %s397, 1
        %s402 = smul.addr %s399, 2
        %s403 = sadd.s32 %s401, %s402
        %s404 = smul.addr %s403, 4
        %s405 = scalar_lea.vmem %s6, %s404
        %s406 = smul.u32 2, %s29
        %v407 = vld [vmem:[%s364] sm:$0x3]
        %v408 = vld [vmem:[%s374] sm:$0x77]
        %v409 = vld [vmem:[%s383] sm:$0x3]
        %v410 = vlaneseq
        %v411 = vshrl.u32 %v410, 7
        %v412 = vlaneseq
        %v413 = vshrl.u32 %v412, 7
        %v414 = vsub.s32 0, %v413
        %v415 = vrot.slane %v407, %v414
        %v416 = vlaneseq
        %v417 = vshrl.u32 %v416, 7
        %v418 = vsub.s32 1, %v417
        %v419 = vrot.slane %v407, %v418
        %vm420 = vcmp.eq.s32.totalorder %v411, %v415
        %vm421 = vcmp.eq.s32.totalorder %v411, %v419
        %v422 = vsel %vm420, 1, 0
        %v423 = vsel %vm421, 1, 0
        %v424 = vcvt.s32.f32 %v422
        %v425 = vcvt.s32.f32 %v423
        %v426 = vpack.c.bf16 %v424, %v424
        %v427 = vpack.c.bf16 %v425, %v425
        %v430 = vcombine.low %v426, %v427
        %v432 = vunpack.c.l.s4 1983009808
        %v433 = vunpack.c.0.s8 %v432
        %v434 = vlaneseq
        %v435 = vshrl.u32 %v434, 7
        %v436 = vsub.s32 %v433, %v435
        %v437 = vrot.slane %v430, %v436
        %439 = vst [vmem:[%s327] sm:$0xf] %v437
        %v441 = vlaneseq
        %v442 = vshrl.u32 %v441, 7
        %v443 = vsub.s32 0, %v442
        %v444 = vrot.slane %v409, %v443
        %v445 = vlaneseq
        %v446 = vshrl.u32 %v445, 7
        %v447 = vsub.s32 1, %v446
        %v448 = vrot.slane %v409, %v447
        %v451 = vmul.f32 %v444, %v424
        %v452 = vmul.f32 %v448, %v425
        %v453 = vpack.c.bf16 %v451, %v451
        %v454 = vpack.c.bf16 %v452, %v452
        %v457 = vcombine.low %v453, %v454
        %v459 = vunpack.c.l.s4 1983009808
        %v460 = vunpack.c.0.s8 %v459
        %v461 = vlaneseq
        %v462 = vshrl.u32 %v461, 7
        %v463 = vsub.s32 %v460, %v462
        %v464 = vrot.slane %v457, %v463
        %466 = vst [vmem:[%s345] sm:$0xf] %v464
        %v467 = vmul.f32 %v408, 2.0
        %v468 = vsub.f32 %v467, 1.0
        %469 = vst [vmem:[%s394] sm:$0x77] %v468
        %v471 = vcombine.high %v408, %v408
        %v473 = vmul.f32 %v444, %v408
        %v474 = vmul.f32 %v448, %v471
        %v475 = vmul.f32 %v473, 2.0
        %v476 = vmul.f32 %v474, 2.0
        %v477 = vsub.f32 %v475, 1.0
        %v478 = vsub.f32 %v476, 1.0
        %v481 = vcombine.low %v477, %v478
        %483 = vst [vmem:[%s405] sm:$0x77] %v481
        %s484 = sand.u32 %s130, 1
        %s485 = scalar_lea.sflag [#allocation3], %s484
        %s486 = sand.u32 %s130, 1
        %s487 = smul.addr %s486, 4
        %s488 = scalar_lea.vmem [#allocation2], %s487
        %s489 = smul.u32 2, %s29
        %p490 = scmp.lt.s32.totalorder %s28, 1
        %s491 = scalar_select %p490, %s28, 1
        %p492 = scmp.lt.s32.totalorder %s489, 1
        %s493 = scalar_select %p492, %s489, 1
        %s494 = smul.addr %s491, 2
        %s495 = sadd.s32 %s493, %s494
        %s496 = smul.addr %s495, 4
        %s497 = scalar_lea.vmem %s4, %s496
        %s498 = sand.u32 %s186, 1
        %s499 = scalar_lea.sflag [#allocation5], %s498
        %s500 = sand.u32 %s186, 1
        %s501 = smul.addr %s500, 4
        %s502 = scalar_lea.vmem [#allocation4], %s501
        %s503 = smul.u32 2, %s29
        %p504 = scmp.lt.s32.totalorder %s28, 1
        %s505 = scalar_select %p504, %s28, 1
        %p506 = scmp.lt.s32.totalorder %s503, 1
        %s507 = scalar_select %p506, %s503, 1
        %s508 = smul.addr %s505, 2
        %s509 = sadd.s32 %s507, %s508
        %s510 = smul.addr %s509, 4
        %s511 = scalar_lea.vmem %s6, %s510
        // Predicated region
        $region33: #{tpu_custom_call.1} parent=31 // pred_check
          %p512 = pneg %p140
        $region34: #{tpu_custom_call.1} parent=31 // pred_check_branch
          %514 = sbr.rel (%p512) target = $region36
        $region35: #{tpu_custom_call.1} parent=31 // pred_region
          %s515 = smul.u32 2, %s29
          %s517 = ssub.s32 64, 64
          %518 = vsyncadd %s485, %s517
          %s519 = smul.addr %s28, 2
          %s520 = sadd.s32 %s515, %s519
          %s521 = smul.addr %s520, 32
          %s522 = scalar_lea.hbm %s3, %s521
          %s524 = sshll.u32 %s488, 4
          %s525 = int_to_ptr.vmem [resolvable:$true] %s524
          %527 = dma.vmem_to_hbm [thread:$0]  %s525, 64, %s522, %s485
        $region36: #{tpu_custom_call.1} parent=31 // pred_fallthru
          _
        // Predicated region
        $region37: #{tpu_custom_call.1} parent=31 // pred_check
          %p528 = pneg %p168
        $region38: #{tpu_custom_call.1} parent=31 // pred_check_branch
          %530 = sbr.rel (%p528) target = $region40
        $region39: #{tpu_custom_call.1} parent=31 // pred_region
          %s531 = smul.u32 2, %s29
        $region40: #{tpu_custom_call.1} parent=31 // pred_fallthru
          _
        // Predicated region
        $region41: #{tpu_custom_call.1} parent=31 // pred_check
          %p532 = pneg %p196
        $region42: #{tpu_custom_call.1} parent=31 // pred_check_branch
          %534 = sbr.rel (%p532) target = $region44
        $region43: #{tpu_custom_call.1} parent=31 // pred_region
          %s535 = smul.u32 2, %s29
          %s537 = ssub.s32 64, 64
          %538 = vsyncadd %s499, %s537
          %s539 = smul.addr %s28, 2
          %s540 = sadd.s32 %s535, %s539
          %s541 = smul.addr %s540, 32
          %s542 = scalar_lea.hbm %s5, %s541
          %s544 = sshll.u32 %s502, 4
          %s545 = int_to_ptr.vmem [resolvable:$true] %s544
          %547 = dma.vmem_to_hbm [thread:$0]  %s545, 64, %s542, %s499
        $region44: #{tpu_custom_call.1} parent=31 // pred_fallthru
          _
        // Predicated region
        $region45: #{tpu_custom_call.1} parent=31 // pred_check
          %p548 = pneg %p224
        $region46: #{tpu_custom_call.1} parent=31 // pred_check_branch
          %550 = sbr.rel (%p548) target = $region48
        $region47: #{tpu_custom_call.1} parent=31 // pred_region
          %s551 = smul.u32 2, %s29
        $region48: #{tpu_custom_call.1} parent=31 // pred_fallthru
          _
      $region32: #{tpu_custom_call.1} parent=5 // pred_fallthru
        _
      %p552 = scmp.le.s32.totalorder 2, %s19
      // Predicated region
      $region49: #{tpu_custom_call.1} parent=5 // pred_check
        %p553 = pneg %p552
      $region50: #{tpu_custom_call.1} parent=5 // pred_check_branch
        %555 = sbr.rel (%p553) target = $region52
      $region51: #{tpu_custom_call.1} parent=5 // pred_region
        %s556 = ssub.s32 %s19, 2
        // Predicated region
        $region53: #{tpu_custom_call.1} parent=51 // pred_check
          %p557 = pneg %p146
        $region54: #{tpu_custom_call.1} parent=51 // pred_check_branch
          %559 = sbr.rel (%p557) target = $region56
        $region55: #{tpu_custom_call.1} parent=51 // pred_region
          %s560 = sand.u32 %s131, 1
          %s561 = scalar_lea.sflag [#allocation3], %s560
          %s562 = sand.u32 %s131, 1
          %s563 = smul.addr %s562, 4
          %s564 = scalar_lea.vmem [#allocation2], %s563
          %565 = dma.done %s561, 64
        $region56: #{tpu_custom_call.1} parent=51 // pred_fallthru
          _
        // Predicated region
        $region57: #{tpu_custom_call.1} parent=51 // pred_check
          %p566 = pneg %p174
        $region58: #{tpu_custom_call.1} parent=51 // pred_check_branch
          %568 = sbr.rel (%p566) target = $region60
        $region59: #{tpu_custom_call.1} parent=51 // pred_region
          %s569 = smul.u32 2, %s31
          %p570 = scmp.lt.s32.totalorder %s30, 1
          %s571 = scalar_select %p570, %s30, 1
          %p572 = scmp.lt.s32.totalorder %s569, 1
          %s573 = scalar_select %p572, %s569, 1
          %s574 = smul.addr %s571, 2
          %s575 = sadd.s32 %s573, %s574
          %s576 = smul.addr %s575, 4
          %s577 = scalar_lea.vmem %s4, %s576
        $region60: #{tpu_custom_call.1} parent=51 // pred_fallthru
          _
        // Predicated region
        $region61: #{tpu_custom_call.1} parent=51 // pred_check
          %p578 = pneg %p202
        $region62: #{tpu_custom_call.1} parent=51 // pred_check_branch
          %580 = sbr.rel (%p578) target = $region64
        $region63: #{tpu_custom_call.1} parent=51 // pred_region
          %s581 = sand.u32 %s187, 1
          %s582 = scalar_lea.sflag [#allocation5], %s581
          %s583 = sand.u32 %s187, 1
          %s584 = smul.addr %s583, 4
          %s585 = scalar_lea.vmem [#allocation4], %s584
          %586 = dma.done %s582, 64
        $region64: #{tpu_custom_call.1} parent=51 // pred_fallthru
          _
        // Predicated region
        $region65: #{tpu_custom_call.1} parent=51 // pred_check
          %p587 = pneg %p230
        $region66: #{tpu_custom_call.1} parent=51 // pred_check_branch
          %589 = sbr.rel (%p587) target = $region68
        $region67: #{tpu_custom_call.1} parent=51 // pred_region
          %s590 = smul.u32 2, %s31
          %p591 = scmp.lt.s32.totalorder %s30, 1
          %s592 = scalar_select %p591, %s30, 1
          %p593 = scmp.lt.s32.totalorder %s590, 1
          %s594 = scalar_select %p593, %s590, 1
          %s595 = smul.addr %s592, 2
          %s596 = sadd.s32 %s594, %s595
          %s597 = smul.addr %s596, 4
          %s598 = scalar_lea.vmem %s6, %s597
        $region68: #{tpu_custom_call.1} parent=51 // pred_fallthru
          _
      $region52: #{tpu_custom_call.1} parent=5 // pred_fallthru
        _
    $region6: #{tpu_custom_call.1} parent=1 // loop_footer
      %s23 = sadd.s32 1, %s19
    $region7: #{tpu_custom_call.1} parent=1 // loop_footer_branch
      %18 = sbr.rel target = $region3
    $region8: #{tpu_custom_call.1} parent=1 // loop_exit
      _
    %599 = vsyncpa [#allocation3], 1
    %s600 = scalar_lea.sflag [#allocation3], 1
    %601 = vsyncpa %s600, 1
    %602 = vsyncpa [#allocation5], 1
    %s603 = scalar_lea.sflag [#allocation5], 1
    %604 = vsyncpa %s603, 1

</llo_original>
